<compile_context>
chip_gen: v6e
topology: v6e:2x2x1
jax: 0.10.0
libtpu: 0.0.40
codegen_flags: <defaults>
</compile_context>

<pallas_src>
import functools

import jax
import jax.numpy as jnp
from jax.experimental import pallas as pl
from jax.experimental.pallas import tpu as pltpu


def _round_up(x, m):
    return (x + m - 1) // m * m


def _decoder_kernel(src_ref, dst_ref, z1t_ref, g_ref, out_ref, *, d_feat):
    """One edge tile.  Everything is lane-dense along the edge axis.

    src_ref, dst_ref : (1, TE)   int32   edge endpoints
    z1t_ref          : (Dp, Npad) f32    rows 0..D-1 = z1^T, row D = z2[:,0], rest 0
    g_ref            : (2, TE)   f32     gumbel noise (row 0 -> logit of vf, row 1 -> logit of 0)
    out_ref          : (1, TE)   f32     edge scores
    """
    n_pad = z1t_ref.shape[1]
    te = src_ref.shape[1]

    src = src_ref[...]            # (1, TE) int32
    dst = dst_ref[...]            # (1, TE) int32
    z1t = z1t_ref[...]            # (Dp, Npad) f32
    g = g_ref[...]                # (2, TE) f32

    # One-hot gather via MXU, transposed so edges land on lanes:
    #   onehot (Npad, TE); z1t (Dp, Npad) @ onehot -> gathered (Dp, TE).
    node_ids = jax.lax.broadcasted_iota(jnp.int32, (n_pad, te), 0)
    oh_src = (node_ids == src).astype(jnp.float32)        # (Npad, TE)
    oh_dst = (node_ids == dst).astype(jnp.float32)        # (Npad, TE)

    gs = jnp.dot(z1t, oh_src, preferred_element_type=jnp.float32)   # (Dp, TE)
    gd = jnp.dot(z1t, oh_dst, preferred_element_type=jnp.float32)   # (Dp, TE)

    # Inner product over the first D feature rows (sublane reduction on XLU).
    vf = jnp.sum(gs[:d_feat, :] * gd[:d_feat, :], axis=0, keepdims=True)   # (1, TE)
    # Network value comes for free from the folded z2 row.
    vn = gs[d_feat:d_feat + 1, :] + gd[d_feat:d_feat + 1, :]               # (1, TE)

    # Hard Gumbel-softmax argmax over [vf + g0, 0 + g1]; /tau dropped (invariant).
    flag = (vf + g[0:1, :] >= g[1:2, :]).astype(jnp.float32)               # (1, TE)

    out_ref[...] = flag * jax.nn.sigmoid(vf) + (1.0 - flag) * jax.nn.sigmoid(vn)


def inner_product_decoder2(z1, z2, temp, edge_index, gumbel_noise, *, edge_tile=512):
    """Training-path forward of InnerProductDecoder2.

    z1: (N, D) f32, z2: (N, K>=1) f32, temp: tau > 0 (unused in the forward:
    the hard argmax is invariant to the division), edge_index: (2, E) int,
    gumbel_noise: (E, 2) f32.  Returns (E,) f32 edge scores.
    """
    del temp  # hard argmax is invariant to dividing both logits by tau > 0
    N, D = z1.shape
    E = edge_index.shape[1]

    edge_tile = max(128, _round_up(edge_tile, 128))
    e_pad = max(_round_up(E, edge_tile), edge_tile)
    num_tiles = e_pad // edge_tile
    n_pad = max(_round_up(N, 128), 128)   # pad contraction dim to full lanes
    dp = _round_up(D + 1, 8)              # features + folded z2 row, sublane aligned

    # Augmented, transposed, zero-padded node matrix: (Dp, Npad).
    z1_aug = jnp.zeros((n_pad, dp), jnp.float32)
    z1_aug = z1_aug.at[:N, :D].set(z1.astype(jnp.float32))
    z1_aug = z1_aug.at[:N, D].set(z2[:, 0].astype(jnp.float32))
    z1t = z1_aug.T                                            # (Dp, Npad)

    # Edge-axis-on-lanes inputs, zero padded to a whole number of tiles.
    src = jnp.zeros((1, e_pad), jnp.int32).at[0, :E].set(edge_index[0].astype(jnp.int32))
    dst = jnp.zeros((1, e_pad), jnp.int32).at[0, :E].set(edge_index[1].astype(jnp.int32))
    g = jnp.zeros((2, e_pad), jnp.float32).at[:, :E].set(
        gumbel_noise.astype(jnp.float32).T)

    # Explicit VMEM budget: resident z1^T + double-buffered edge streams +
    # per-tile temporaries (one-hots, gathered tiles).  Floor at the 32 MiB
    # default, cap below v7x's 64 MiB physical VMEM.
    resident = dp * n_pad * 4
    streams = 2 * (2 * edge_tile * 4 + 2 * edge_tile * 4 + edge_tile * 4)
    temps = 2 * n_pad * edge_tile * 4 + 4 * dp * edge_tile * 4
    vmem_limit = min(max(32 * 1024 * 1024, resident + streams + temps + (4 << 20)),
                     60 * 1024 * 1024)

    kernel = functools.partial(_decoder_kernel, d_feat=D)
    out = pl.pallas_call(
        kernel,
        out_shape=jax.ShapeDtypeStruct((1, e_pad), jnp.float32),
        grid=(num_tiles,),
        in_specs=[
            pl.BlockSpec((1, edge_tile), lambda i: (0, i)),   # src
            pl.BlockSpec((1, edge_tile), lambda i: (0, i)),   # dst
            pl.BlockSpec((dp, n_pad), lambda i: (0, 0)),      # z1_aug^T (resident)
            pl.BlockSpec((2, edge_tile), lambda i: (0, i)),   # gumbel
        ],
        out_specs=pl.BlockSpec((1, edge_tile), lambda i: (0, i)),
        compiler_params=pltpu.CompilerParams(
            dimension_semantics=("parallel",),
            vmem_limit_bytes=vmem_limit,
        ),
    )(src, dst, z1t, g)
    return out[0, :E]


def _reference(z1, z2, temp, edge_index, gumbel_noise):
    src, dst = edge_index[0], edge_index[1]
    vf = jnp.sum(z1[src] * z1[dst], axis=1)
    logit0 = (vf + gumbel_noise[:, 0]) / temp
    logit1 = (0.0 + gumbel_noise[:, 1]) / temp
    flag = (logit0 >= logit1).astype(jnp.float32)
    vn = z2[src, 0] + z2[dst, 0]
    return flag * jax.nn.sigmoid(vf) + (1.0 - flag) * jax.nn.sigmoid(vn)


if __name__ == "__main__":
    key = jax.random.PRNGKey(0)
    k1, k2, k3, k4 = jax.random.split(key, 4)

    N, D, E = 64, 32, 600        # nodes, latent dim, edges (2 edge tiles at TE=512)
    temp = 0.5

    z1 = jax.random.normal(k1, (N, D), dtype=jnp.float32)
    z2 = jax.random.normal(k2, (N, 2), dtype=jnp.float32)
    edge_index = jax.random.randint(k3, (2, E), 0, N, dtype=jnp.int32)
    # Gumbel noise drawn outside the kernel so the stochastic forward is
    # deterministic w.r.t. the PRNG key (same role as torch's in-op sampling).
    gumbel_noise = jax.random.gumbel(k4, (E, 2), dtype=jnp.float32)

    out = inner_product_decoder2(z1, z2, temp, edge_index, gumbel_noise, edge_tile=512)
    out = jax.block_until_ready(out)

    ref = _reference(z1, z2, temp, edge_index, gumbel_noise)
    assert out.shape == (E,)
    assert jnp.allclose(out, ref, atol=1e-5, rtol=1e-5), (out, ref)

    print("KERNEL_OK")
</pallas_src>

<mosaic_0001>
module attributes {stable_mosaic.version = 11 : i64} {
  func.func @_decoder_kernel(%arg0: i32, %arg1: memref<1x512xi32, #tpu.memory_space<vmem>>, %arg2: memref<1x512xi32, #tpu.memory_space<vmem>>, %arg3: memref<40x128xf32, #tpu.memory_space<vmem>>, %arg4: memref<2x512xf32, #tpu.memory_space<vmem>>, %arg5: memref<1x512xf32, #tpu.memory_space<vmem>>) attributes {dimension_semantics = [#tpu.dimension_semantics<parallel>], iteration_bounds = array<i64: 2>, scalar_prefetch = 0 : i64, scratch_operands = 0 : i64, tpu.core_type = #tpu.core_type<tc>, window_params = [{transform_indices = @transform_0, window_bounds = array<i64: 1, 512>}, {transform_indices = @transform_1, window_bounds = array<i64: 1, 512>}, {pipeline_mode = #tpu.pipeline_mode<synchronous>, transform_indices = @transform_2, window_bounds = array<i64: 40, 128>}, {transform_indices = @transform_3, window_bounds = array<i64: 2, 512>}, {transform_indices = @transform_4, window_bounds = array<i64: 1, 512>}]} {
    %c0 = arith.constant 0 : index
    %c0_0 = arith.constant 0 : index
    %0 = vector.load %arg1[%c0, %c0_0] : memref<1x512xi32, #tpu.memory_space<vmem>>, vector<1x512xi32>
    %c0_1 = arith.constant 0 : index
    %c0_2 = arith.constant 0 : index
    %1 = vector.load %arg2[%c0_1, %c0_2] : memref<1x512xi32, #tpu.memory_space<vmem>>, vector<1x512xi32>
    %c0_3 = arith.constant 0 : index
    %c0_4 = arith.constant 0 : index
    %2 = vector.load %arg3[%c0_3, %c0_4] : memref<40x128xf32, #tpu.memory_space<vmem>>, vector<40x128xf32>
    %c0_5 = arith.constant 0 : index
    %c0_6 = arith.constant 0 : index
    %3 = vector.load %arg4[%c0_5, %c0_6] : memref<2x512xf32, #tpu.memory_space<vmem>>, vector<2x512xf32>
    %4 = tpu.iota {dimensions = array<i32: 0>} : vector<128x512xi32>
    %5 = vector.broadcast %0 : vector<1x512xi32> to vector<128x512xi32>
    %6 = arith.cmpi eq, %4, %5 : vector<128x512xi32>
    %7 = arith.extui %6 : vector<128x512xi1> to vector<128x512xi32>
    %8 = arith.sitofp %7 : vector<128x512xi32> to vector<128x512xf32>
    %9 = vector.broadcast %1 : vector<1x512xi32> to vector<128x512xi32>
    %10 = arith.cmpi eq, %4, %9 : vector<128x512xi32>
    %11 = arith.extui %10 : vector<128x512xi1> to vector<128x512xi32>
    %12 = arith.sitofp %11 : vector<128x512xi32> to vector<128x512xf32>
    %cst = arith.constant dense<0.000000e+00> : vector<40x512xf32>
    %13 = tpu.matmul %2, %8, %cst {dimension_numbers = #tpu.dot_dimension_numbers<[1], [0], [0], [1], [0, 0, 1, 1], [], []>} : vector<40x128xf32>, vector<128x512xf32>, vector<40x512xf32> -> vector<40x512xf32>
    %cst_7 = arith.constant dense<0.000000e+00> : vector<40x512xf32>
    %14 = tpu.matmul %2, %12, %cst_7 {dimension_numbers = #tpu.dot_dimension_numbers<[1], [0], [0], [1], [0, 0, 1, 1], [], []>} : vector<40x128xf32>, vector<128x512xf32>, vector<40x512xf32> -> vector<40x512xf32>
    %15 = vector.extract_strided_slice %13 {offsets = [0, 0], sizes = [32, 512], strides = [1, 1]} : vector<40x512xf32> to vector<32x512xf32>
    %16 = vector.extract_strided_slice %14 {offsets = [0, 0], sizes = [32, 512], strides = [1, 1]} : vector<40x512xf32> to vector<32x512xf32>
    %17 = arith.mulf %15, %16 : vector<32x512xf32>
    %cst_8 = arith.constant dense<0.000000e+00> : vector<512xf32>
    %18 = vector.multi_reduction <add>, %17, %cst_8 [0] : vector<32x512xf32> to vector<512xf32>
    %19 = vector.shape_cast %18 : vector<512xf32> to vector<1x512xf32>
    %20 = vector.extract_strided_slice %13 {offsets = [32, 0], sizes = [1, 512], strides = [1, 1]} : vector<40x512xf32> to vector<1x512xf32>
    %21 = vector.extract_strided_slice %14 {offsets = [32, 0], sizes = [1, 512], strides = [1, 1]} : vector<40x512xf32> to vector<1x512xf32>
    %22 = arith.addf %20, %21 : vector<1x512xf32>
    %23 = vector.extract_strided_slice %3 {offsets = [0, 0], sizes = [1, 512], strides = [1, 1]} : vector<2x512xf32> to vector<1x512xf32>
    %24 = arith.addf %19, %23 : vector<1x512xf32>
    %25 = vector.extract_strided_slice %3 {offsets = [1, 0], sizes = [1, 512], strides = [1, 1]} : vector<2x512xf32> to vector<1x512xf32>
    %26 = arith.cmpf oge, %24, %25 : vector<1x512xf32>
    %27 = arith.extui %26 : vector<1x512xi1> to vector<1x512xi32>
    %28 = arith.sitofp %27 : vector<1x512xi32> to vector<1x512xf32>
    %29 = arith.negf %19 : vector<1x512xf32>
    %30 = math.exp %29 : vector<1x512xf32>
    %cst_9 = arith.constant 1.000000e+00 : f32
    %31 = vector.broadcast %cst_9 : f32 to vector<1x512xf32>
    %32 = arith.addf %31, %30 : vector<1x512xf32>
    %33 = arith.divf %31, %32 : vector<1x512xf32>
    %34 = arith.mulf %28, %33 : vector<1x512xf32>
    %cst_10 = arith.constant 1.000000e+00 : f32
    %35 = vector.broadcast %cst_10 : f32 to vector<1x512xf32>
    %36 = arith.subf %35, %28 : vector<1x512xf32>
    %37 = arith.negf %22 : vector<1x512xf32>
    %38 = math.exp %37 : vector<1x512xf32>
    %cst_11 = arith.constant 1.000000e+00 : f32
    %39 = vector.broadcast %cst_11 : f32 to vector<1x512xf32>
    %40 = arith.addf %39, %38 : vector<1x512xf32>
    %41 = arith.divf %39, %40 : vector<1x512xf32>
    %42 = arith.mulf %36, %41 : vector<1x512xf32>
    %43 = arith.addf %34, %42 : vector<1x512xf32>
    %c0_12 = arith.constant 0 : index
    %c0_13 = arith.constant 0 : index
    %44 = vector.load %arg5[%c0_12, %c0_13] : memref<1x512xf32, #tpu.memory_space<vmem>>, vector<1x512xf32>
    tpu.vector_store %arg5[%c0_12, %c0_13], %43 {strides = array<i32>} : memref<1x512xf32, #tpu.memory_space<vmem>>, vector<1x512xf32>,
    return
  }
  func.func @transform_0(%arg0: i32) -> (i32, i32) {
    %c0_i32 = arith.constant 0 : i32
    %c0_i32_0 = arith.constant 0 : i32
    return %c0_i32, %arg0 : i32, i32
  }
  func.func @transform_1(%arg0: i32) -> (i32, i32) {
    %c0_i32 = arith.constant 0 : i32
    %c0_i32_0 = arith.constant 0 : i32
    return %c0_i32, %arg0 : i32, i32
  }
  func.func @transform_2(%arg0: i32) -> (i32, i32) {
    %c0_i32 = arith.constant 0 : i32
    %c0_i32_0 = arith.constant 0 : i32
    %c0_i32_1 = arith.constant 0 : i32
    return %c0_i32, %c0_i32_0 : i32, i32
  }
  func.func @transform_3(%arg0: i32) -> (i32, i32) {
    %c0_i32 = arith.constant 0 : i32
    %c0_i32_0 = arith.constant 0 : i32
    return %c0_i32, %arg0 : i32, i32
  }
  func.func @transform_4(%arg0: i32) -> (i32, i32) {
    %c0_i32 = arith.constant 0 : i32
    %c0_i32_0 = arith.constant 0 : i32
    return %c0_i32, %arg0 : i32, i32
  }
}

</mosaic_0001>

<llo_original>
// kernel: tpu_custom_call.1
$region0: #{tpu_custom_call.1}
  #allocation0 [shape = 'u32[]', space=smem, size = 0x4, offset = 0x4, fixed_abs, tag = 'smem constant byte address 0x4 - core index']
  #allocation1 [shape = 'u32[144,128]{1,0:T(1,128)}', space=vmem, size = 0x12000, scoped, tag = 'internal scratch']
  %s0 = inlined_call_operand.hbm [shape: s32[1,1024], index: 0, kind: input, shape index: {}]
  %s1 = inlined_call_operand.hbm [shape: s32[1,1024], index: 1, kind: input, shape index: {}]
  %s2 = inlined_call_operand.hbm [shape: f32[40,128], index: 2, kind: input, shape index: {}]
  %s3 = inlined_call_operand.hbm [shape: f32[2,1024], index: 3, kind: input, shape index: {}]
  %s4 = inlined_call_operand.hbm [shape: f32[1,1024], index: 4, kind: output, shape index: {}]
  %s5 = sld [smem:[#allocation0]]
  $region65: #{tpu_custom_call.1} parent=0
    _
  %s7 = ssub.s32 1, %s5
  %s8 = scalar_select 0, %s7, %s5
  $region1: #{tpu_custom_call.1} parent=0
    #allocation2 [shape = 'u8[4096]{0}', space=vmem, size = 0x1000, scoped, tag = 'input window, operand 0']
    #allocation3 [shape = 's32[2]{0}', space=sflag, size = 0x8, scoped, tag = 'scoped memory for tpu_custom_call.1']
    #allocation4 [shape = 's32[2]{0}', space=sflag, size = 0x8, scoped, tag = 'scoped memory for tpu_custom_call.1']
    #allocation5 [shape = 'u8[4096]{0}', space=vmem, size = 0x1000, scoped, tag = 'input window, operand 1']
    #allocation6 [shape = 's32[2]{0}', space=sflag, size = 0x8, scoped, tag = 'scoped memory for tpu_custom_call.1']
    #allocation7 [shape = 'u8[20480]{0}', space=vmem, size = 0x5000, scoped, tag = 'input window, operand 2, single buffered']
    #allocation8 [shape = 'u8[8192]{0}', space=vmem, size = 0x2000, scoped, tag = 'input window, operand 3']
    #allocation9 [shape = 's32[2]{0}', space=sflag, size = 0x8, scoped, tag = 'scoped memory for tpu_custom_call.1']
    #allocation10 [shape = 'u8[4096]{0}', space=vmem, size = 0x1000, scoped, tag = 'output window, operand 0']
    %9 = vsyncpa [#allocation3], 0
    %s10 = scalar_lea.sflag [#allocation3], 1
    %11 = vsyncpa %s10, 0
    %12 = vsyncpa [#allocation6], 0
    %s13 = scalar_lea.sflag [#allocation6], 1
    %14 = vsyncpa %s13, 0
    %15 = vsyncpa [#allocation9], 0
    %s16 = scalar_lea.sflag [#allocation9], 1
    %17 = vsyncpa %s16, 0
    %18 = vsyncpa [#allocation4], 0
    %s19 = scalar_lea.sflag [#allocation4], 1
    %20 = vsyncpa %s19, 0
    loop: start=0, step=1, limit=4
    $region2: #{tpu_custom_call.1} parent=1 // loop_pre_header
      _
    $region3: #{tpu_custom_call.1} parent=1 // loop_header
      %s22 = sphi 0, %s26
      %p23 = scmp.ge.s32.totalorder %s22, 4
      %s32 = sphi 0, %s34
      %s35 = sphi 0, %s32
      %s36 = sphi 0, %s35
      %s52 = sphi 0, %s36
      %s58 = sphi 0, %s60
      %s61 = sphi 0, %s58
      %s62 = sphi 0, %s61
      %s78 = sphi 0, %s62
      %s82 = sphi 0, %s82
      %s84 = sphi 0, %s82
      %s85 = sphi 0, %s84
      %s99 = sphi 0, %s85
      %s105 = sphi 0, %s107
      %s108 = sphi 0, %s105
      %s109 = sphi 0, %s108
      %s125 = sphi 0, %s109
      %s131 = sphi 0, %s133
      %s134 = sphi 0, %s131
      %s135 = sphi 0, %s134
      %s151 = sphi 0, %s135
    $region4: #{tpu_custom_call.1} parent=1 // loop_header_branch
      %25 = sbr.rel (%p23) target = $region8
    $region5: #{tpu_custom_call.1} parent=1 // loop_body
      %s27 = ssub.s32 %s22, 1
      %s28 = ssub.s32 %s22, 2
      %s29 = sadd.s32 %s22, 1
      %s30 = ssub.s32 %s22, %s29
      %p31 = scmp.eq.s32.totalorder %s30, 0
      %s33 = sadd.s32 %s32, 1
      %s34 = scalar_select %p31, %s32, %s33
      %p37 = pneg %p31
      %p38 = scmp.eq.s32.totalorder %s22, 1
      %p39 = por %p37, %p38
      %p40 = scmp.ne.s32.totalorder %s32, %s35
      %p41 = scmp.eq.s32.totalorder %s22, 0
      %p42 = por %p40, %p41
      %p43 = scmp.ne.s32.totalorder %s32, %s35
      %p44 = scmp.eq.s32.totalorder %s27, 1
      %p45 = por %p43, %p44
      %p46 = scmp.ne.s32.totalorder %s35, %s36
      %p47 = scmp.eq.s32.totalorder %s27, 0
      %p48 = por %p46, %p47
      %p49 = scmp.ne.s32.totalorder %s35, %s36
      %p50 = scmp.eq.s32.totalorder %s28, 1
      %p51 = por %p49, %p50
      %p53 = scmp.ne.s32.totalorder %s36, %s52
      %p54 = scmp.eq.s32.totalorder %s28, 0
      %p55 = por %p53, %p54
      %s56 = ssub.s32 %s22, %s29
      %p57 = scmp.eq.s32.totalorder %s56, 0
      %s59 = sadd.s32 %s58, 1
      %s60 = scalar_select %p57, %s58, %s59
      %p63 = pneg %p57
      %p64 = scmp.eq.s32.totalorder %s22, 1
      %p65 = por %p63, %p64
      %p66 = scmp.ne.s32.totalorder %s58, %s61
      %p67 = scmp.eq.s32.totalorder %s22, 0
      %p68 = por %p66, %p67
      %p69 = scmp.ne.s32.totalorder %s58, %s61
      %p70 = scmp.eq.s32.totalorder %s27, 1
      %p71 = por %p69, %p70
      %p72 = scmp.ne.s32.totalorder %s61, %s62
      %p73 = scmp.eq.s32.totalorder %s27, 0
      %p74 = por %p72, %p73
      %p75 = scmp.ne.s32.totalorder %s61, %s62
      %p76 = scmp.eq.s32.totalorder %s28, 1
      %p77 = por %p75, %p76
      %p79 = scmp.ne.s32.totalorder %s62, %s78
      %p80 = scmp.eq.s32.totalorder %s28, 0
      %p81 = por %p79, %p80
      %s83 = sadd.s32 %s82, 1
      %p86 = scmp.eq.s32.totalorder %s22, 1
      %p87 = scmp.ne.s32.totalorder %s82, %s84
      %p88 = scmp.eq.s32.totalorder %s22, 0
      %p89 = por %p87, %p88
      %p90 = scmp.ne.s32.totalorder %s82, %s84
      %p91 = scmp.eq.s32.totalorder %s27, 1
      %p92 = por %p90, %p91
      %p93 = scmp.ne.s32.totalorder %s84, %s85
      %p94 = scmp.eq.s32.totalorder %s27, 0
      %p95 = por %p93, %p94
      %p96 = scmp.ne.s32.totalorder %s84, %s85
      %p97 = scmp.eq.s32.totalorder %s28, 1
      %p98 = por %p96, %p97
      %p100 = scmp.ne.s32.totalorder %s85, %s99
      %p101 = scmp.eq.s32.totalorder %s28, 0
      %p102 = por %p100, %p101
      %s103 = ssub.s32 %s22, %s29
      %p104 = scmp.eq.s32.totalorder %s103, 0
      %s106 = sadd.s32 %s105, 1
      %s107 = scalar_select %p104, %s105, %s106
      %p110 = pneg %p104
      %p111 = scmp.eq.s32.totalorder %s22, 1
      %p112 = por %p110, %p111
      %p113 = scmp.ne.s32.totalorder %s105, %s108
      %p114 = scmp.eq.s32.totalorder %s22, 0
      %p115 = por %p113, %p114
      %p116 = scmp.ne.s32.totalorder %s105, %s108
      %p117 = scmp.eq.s32.totalorder %s27, 1
      %p118 = por %p116, %p117
      %p119 = scmp.ne.s32.totalorder %s108, %s109
      %p120 = scmp.eq.s32.totalorder %s27, 0
      %p121 = por %p119, %p120
      %p122 = scmp.ne.s32.totalorder %s108, %s109
      %p123 = scmp.eq.s32.totalorder %s28, 1
      %p124 = por %p122, %p123
      %p126 = scmp.ne.s32.totalorder %s109, %s125
      %p127 = scmp.eq.s32.totalorder %s28, 0
      %p128 = por %p126, %p127
      %s129 = ssub.s32 %s22, %s29
      %p130 = scmp.eq.s32.totalorder %s129, 0
      %s132 = sadd.s32 %s131, 1
      %s133 = scalar_select %p130, %s131, %s132
      %p136 = pneg %p130
      %p137 = scmp.eq.s32.totalorder %s22, 1
      %p138 = por %p136, %p137
      %p139 = scmp.ne.s32.totalorder %s131, %s134
      %p140 = scmp.eq.s32.totalorder %s22, 0
      %p141 = por %p139, %p140
      %p142 = scmp.ne.s32.totalorder %s131, %s134
      %p143 = scmp.eq.s32.totalorder %s27, 1
      %p144 = por %p142, %p143
      %p145 = scmp.ne.s32.totalorder %s134, %s135
      %p146 = scmp.eq.s32.totalorder %s27, 0
      %p147 = por %p145, %p146
      %p148 = scmp.ne.s32.totalorder %s134, %s135
      %p149 = scmp.eq.s32.totalorder %s28, 1
      %p150 = por %p148, %p149
      %p152 = scmp.ne.s32.totalorder %s135, %s151
      %p153 = scmp.eq.s32.totalorder %s28, 0
      %p154 = por %p152, %p153
      %p155 = scmp.le.s32.totalorder 1, %s22
      %p156 = scmp.lt.s32.totalorder %s22, 3
      %p157 = pnand %p155, %p156
      %p158 = pneg %p157
      // Predicated region
      $region9: #{tpu_custom_call.1} parent=5 // pred_check
        _
      $region10: #{tpu_custom_call.1} parent=5 // pred_check_branch
        %160 = sbr.rel (%p157) target = $region12
      $region11: #{tpu_custom_call.1} parent=5 // pred_region
        %s161 = ssub.s32 %s22, 1
        // Predicated region
        $region13: #{tpu_custom_call.1} parent=11 // pred_check
          %p162 = pneg %p95
        $region14: #{tpu_custom_call.1} parent=11 // pred_check_branch
          %164 = sbr.rel (%p162) target = $region16
        $region15: #{tpu_custom_call.1} parent=11 // pred_region
          %s166 = ssub.s32 640, 640
          %167 = vsyncadd [#allocation6], %s166
          %s168 = sshll.u32 [#allocation7], 4
          %s169 = int_to_ptr.vmem [resolvable:$true] %s168
          %174 = dma.hbm_to_vmem [thread:$0]  %s2, 640, %s169, [#allocation6], 128, 128, 8
        $region16: #{tpu_custom_call.1} parent=11 // pred_fallthru
          _
      $region12: #{tpu_custom_call.1} parent=5 // pred_fallthru
        _
      %p175 = scmp.lt.s32.totalorder %s22, 2
      // Predicated region
      $region17: #{tpu_custom_call.1} parent=5 // pred_check
        %p176 = pneg %p175
      $region18: #{tpu_custom_call.1} parent=5 // pred_check_branch
        %178 = sbr.rel (%p176) target = $region20
      $region19: #{tpu_custom_call.1} parent=5 // pred_region
        // Predicated region
        $region21: #{tpu_custom_call.1} parent=19 // pred_check
          %p179 = pneg %p42
        $region22: #{tpu_custom_call.1} parent=19 // pred_check_branch
          %181 = sbr.rel (%p179) target = $region24
        $region23: #{tpu_custom_call.1} parent=19 // pred_region
          %s182 = sand.u32 %s32, 1
          %s183 = scalar_lea.sflag [#allocation3], %s182
          %s184 = sand.u32 %s32, 1
          %s185 = smul.addr %s184, 4
          %s186 = scalar_lea.vmem [#allocation2], %s185
          %s187 = smul.u32 4, %s22
          %s189 = ssub.s32 64, 64
          %190 = vsyncadd %s183, %s189
          %s191 = smul.addr %s187, 16
          %s192 = scalar_lea.hbm %s0, %s191
          %s194 = sshll.u32 %s186, 4
          %s195 = int_to_ptr.vmem [resolvable:$true] %s194
          %197 = dma.hbm_to_vmem [thread:$0]  %s192, 64, %s195, %s183
        $region24: #{tpu_custom_call.1} parent=19 // pred_fallthru
          _
        // Predicated region
        $region25: #{tpu_custom_call.1} parent=19 // pred_check
          %p198 = pneg %p68
        $region26: #{tpu_custom_call.1} parent=19 // pred_check_branch
          %200 = sbr.rel (%p198) target = $region28
        $region27: #{tpu_custom_call.1} parent=19 // pred_region
          %s201 = sand.u32 %s22, 1
          %s202 = scalar_lea.sflag [#allocation6], %s201
          %s203 = sand.u32 %s58, 1
          %s204 = smul.addr %s203, 4
          %s205 = scalar_lea.vmem [#allocation5], %s204
          %s206 = smul.u32 4, %s22
          %s208 = ssub.s32 64, 64
          %209 = vsyncadd %s202, %s208
          %s210 = smul.addr %s206, 16
          %s211 = scalar_lea.hbm %s1, %s210
          %s213 = sshll.u32 %s205, 4
          %s214 = int_to_ptr.vmem [resolvable:$true] %s213
          %216 = dma.hbm_to_vmem [thread:$0]  %s211, 64, %s214, %s202
        $region28: #{tpu_custom_call.1} parent=19 // pred_fallthru
          _
        // Predicated region
        $region29: #{tpu_custom_call.1} parent=19 // pred_check
          %p217 = pneg %p115
        $region30: #{tpu_custom_call.1} parent=19 // pred_check_branch
          %219 = sbr.rel (%p217) target = $region32
        $region31: #{tpu_custom_call.1} parent=19 // pred_region
          %s220 = sand.u32 %s105, 1
          %s221 = scalar_lea.sflag [#allocation9], %s220
          %s222 = sand.u32 %s105, 1
          %s223 = smul.addr %s222, 8
          %s224 = scalar_lea.vmem [#allocation8], %s223
          %s225 = smul.u32 4, %s22
          %s227 = ssub.s32 128, 128
          %228 = vsyncadd %s221, %s227
          %s229 = smul.addr %s225, 32
          %s230 = scalar_lea.hbm %s3, %s229
          %s232 = sshll.u32 %s224, 4
          %s233 = int_to_ptr.vmem [resolvable:$true] %s232
          %235 = dma.hbm_to_vmem [thread:$0]  %s230, 128, %s233, %s221
        $region32: #{tpu_custom_call.1} parent=19 // pred_fallthru
          _
      $region20: #{tpu_custom_call.1} parent=5 // pred_fallthru
        _
      %p236 = scmp.le.s32.totalorder 1, %s22
      %p237 = scmp.lt.s32.totalorder %s22, 3
      %p238 = pnand %p236, %p237
      %p239 = pneg %p238
      // Predicated region
      $region33: #{tpu_custom_call.1} parent=5 // pred_check
        _
      $region34: #{tpu_custom_call.1} parent=5 // pred_check_branch
        %241 = sbr.rel (%p238) target = $region36
      $region35: #{tpu_custom_call.1} parent=5 // pred_region
        %s242 = ssub.s32 %s22, 1
        %s243 = sand.u32 %s35, 1
        %s244 = scalar_lea.sflag [#allocation3], %s243
        %s245 = sand.u32 %s35, 1
        %s246 = smul.addr %s245, 4
        %s247 = scalar_lea.vmem [#allocation2], %s246
        // Predicated region
        $region37: #{tpu_custom_call.1} parent=35 // pred_check
          %p248 = pneg %p48
        $region38: #{tpu_custom_call.1} parent=35 // pred_check_branch
          %250 = sbr.rel (%p248) target = $region40
        $region39: #{tpu_custom_call.1} parent=35 // pred_region
          %251 = dma.done %s244, 64
        $region40: #{tpu_custom_call.1} parent=35 // pred_fallthru
          _
        %s252 = sand.u32 %s27, 1
        %s253 = scalar_lea.sflag [#allocation6], %s252
        %s254 = sand.u32 %s61, 1
        %s255 = smul.addr %s254, 4
        %s256 = scalar_lea.vmem [#allocation5], %s255
        // Predicated region
        $region41: #{tpu_custom_call.1} parent=35 // pred_check
          %p257 = pneg %p74
        $region42: #{tpu_custom_call.1} parent=35 // pred_check_branch
          %259 = sbr.rel (%p257) target = $region44
        $region43: #{tpu_custom_call.1} parent=35 // pred_region
          %260 = dma.done %s253, 64
        $region44: #{tpu_custom_call.1} parent=35 // pred_fallthru
          _
        // Predicated region
        $region45: #{tpu_custom_call.1} parent=35 // pred_check
          %p261 = pneg %p95
        $region46: #{tpu_custom_call.1} parent=35 // pred_check_branch
          %263 = sbr.rel (%p261) target = $region48
        $region47: #{tpu_custom_call.1} parent=35 // pred_region
          %264 = dma.done [#allocation6], 640
        $region48: #{tpu_custom_call.1} parent=35 // pred_fallthru
          _
        %s265 = sand.u32 %s108, 1
        %s266 = scalar_lea.sflag [#allocation9], %s265
        %s267 = sand.u32 %s108, 1
        %s268 = smul.addr %s267, 8
        %s269 = scalar_lea.vmem [#allocation8], %s268
        // Predicated region
        $region49: #{tpu_custom_call.1} parent=35 // pred_check
          %p270 = pneg %p121
        $region50: #{tpu_custom_call.1} parent=35 // pred_check_branch
          %272 = sbr.rel (%p270) target = $region52
        $region51: #{tpu_custom_call.1} parent=35 // pred_region
          %273 = dma.done %s266, 128
        $region52: #{tpu_custom_call.1} parent=35 // pred_fallthru
          _
        %s274 = sand.u32 %s35, 1
        %s275 = scalar_lea.sflag [#allocation3], %s274
        %s276 = sand.u32 %s35, 1
        %s277 = smul.addr %s276, 4
        %s278 = scalar_lea.vmem [#allocation2], %s277
        %p279 = pneg %p48
        %p280 = pneg %p45
        %s281 = sand.u32 %s27, 1
        %s282 = scalar_lea.sflag [#allocation6], %s281
        %s283 = sand.u32 %s61, 1
        %s284 = smul.addr %s283, 4
        %s285 = scalar_lea.vmem [#allocation5], %s284
        %p286 = pneg %p74
        %p287 = pneg %p71
        %p288 = pneg %p95
        %p289 = pneg %p92
        %s290 = sand.u32 %s108, 1
        %s291 = scalar_lea.sflag [#allocation9], %s290
        %s292 = sand.u32 %s108, 1
        %s293 = smul.addr %s292, 8
        %s294 = scalar_lea.vmem [#allocation8], %s293
        %p295 = pneg %p121
        %p296 = pneg %p118
        %p297 = pneg %p147
        %p298 = pneg %p144
        %s299 = sand.u32 %s134, 1
        %s300 = scalar_lea.sflag [#allocation4], %s299
        %s301 = sand.u32 %s134, 1
        %s302 = smul.addr %s301, 4
        %s303 = scalar_lea.vmem [#allocation10], %s302
        %s304 = smul.u32 4, %s27
        %s305 = smul.u32 4, %s27
        %s306 = smul.u32 4, %s27
        %s307 = smul.u32 4, %s27
        %v308 = vld [vmem:[%s247] sm:$0xf]
        %v309 = vld [vmem:[%s256] sm:$0xf]
        %v310 = vld [vmem:[#allocation7] sm:$0xff]
        %v311 = vld [vmem:[#allocation7 + $0x8] sm:$0xff]
        %v312 = vld [vmem:[#allocation7 + $0x10] sm:$0xff]
        %v313 = vld [vmem:[#allocation7 + $0x18] sm:$0xff]
        %v314 = vld [vmem:[#allocation7 + $0x20] sm:$0xff]
        %v315 = vld [vmem:[%s269] sm:$0xff]
        %v316 = vlaneseq
        %v317 = vshrl.u32 %v316, 7
        %v318 = vadd.s32 %v317, 8
        %v319 = vadd.s32 %v317, 16
        %v320 = vadd.s32 %v317, 24
        %v321 = vadd.s32 %v317, 32
        %v322 = vadd.s32 %v317, 40
        %v323 = vadd.s32 %v317, 48
        %v324 = vadd.s32 %v317, 56
        %v325 = vadd.s32 %v317, 64
        %v326 = vadd.s32 %v317, 72
        %v327 = vadd.s32 %v317, 80
        %v328 = vadd.s32 %v317, 88
        %v329 = vadd.s32 %v317, 96
        %v330 = vadd.s32 %v317, 104
        %v331 = vadd.s32 %v317, 112
        %v332 = vadd.s32 %v317, 120
        %v333 = vlaneseq
        %v334 = vshrl.u32 %v333, 7
        %v335 = vsub.s32 0, %v334
        %v336 = vrot.slane %v308, %v335
        %v337 = vlaneseq
        %v338 = vshrl.u32 %v337, 7
        %v339 = vsub.s32 1, %v338
        %v340 = vrot.slane %v308, %v339
        %v341 = vlaneseq
        %v342 = vshrl.u32 %v341, 7
        %v343 = vsub.s32 2, %v342
        %v344 = vrot.slane %v308, %v343
        %v345 = vlaneseq
        %v346 = vshrl.u32 %v345, 7
        %v347 = vsub.s32 3, %v346
        %v348 = vrot.slane %v308, %v347
        %vm349 = vcmp.eq.s32.totalorder %v317, %v336
        %vm350 = vcmp.eq.s32.totalorder %v317, %v340
        %vm351 = vcmp.eq.s32.totalorder %v317, %v344
        %vm352 = vcmp.eq.s32.totalorder %v317, %v348
        %vm353 = vcmp.eq.s32.totalorder %v318, %v336
        %vm354 = vcmp.eq.s32.totalorder %v318, %v340
        %vm355 = vcmp.eq.s32.totalorder %v318, %v344
        %vm356 = vcmp.eq.s32.totalorder %v318, %v348
        %vm357 = vcmp.eq.s32.totalorder %v319, %v336
        %vm358 = vcmp.eq.s32.totalorder %v319, %v340
        %vm359 = vcmp.eq.s32.totalorder %v319, %v344
        %vm360 = vcmp.eq.s32.totalorder %v319, %v348
        %vm361 = vcmp.eq.s32.totalorder %v320, %v336
        %vm362 = vcmp.eq.s32.totalorder %v320, %v340
        %vm363 = vcmp.eq.s32.totalorder %v320, %v344
        %vm364 = vcmp.eq.s32.totalorder %v320, %v348
        %vm365 = vcmp.eq.s32.totalorder %v321, %v336
        %vm366 = vcmp.eq.s32.totalorder %v321, %v340
        %vm367 = vcmp.eq.s32.totalorder %v321, %v344
        %vm368 = vcmp.eq.s32.totalorder %v321, %v348
        %vm369 = vcmp.eq.s32.totalorder %v322, %v336
        %vm370 = vcmp.eq.s32.totalorder %v322, %v340
        %vm371 = vcmp.eq.s32.totalorder %v322, %v344
        %vm372 = vcmp.eq.s32.totalorder %v322, %v348
        %vm373 = vcmp.eq.s32.totalorder %v323, %v336
        %vm374 = vcmp.eq.s32.totalorder %v323, %v340
        %vm375 = vcmp.eq.s32.totalorder %v323, %v344
        %vm376 = vcmp.eq.s32.totalorder %v323, %v348
        %vm377 = vcmp.eq.s32.totalorder %v324, %v336
        %vm378 = vcmp.eq.s32.totalorder %v324, %v340
        %vm379 = vcmp.eq.s32.totalorder %v324, %v344
        %vm380 = vcmp.eq.s32.totalorder %v324, %v348
        %vm381 = vcmp.eq.s32.totalorder %v325, %v336
        %vm382 = vcmp.eq.s32.totalorder %v325, %v340
        %vm383 = vcmp.eq.s32.totalorder %v325, %v344
        %vm384 = vcmp.eq.s32.totalorder %v325, %v348
        %vm385 = vcmp.eq.s32.totalorder %v326, %v336
        %vm386 = vcmp.eq.s32.totalorder %v326, %v340
        %vm387 = vcmp.eq.s32.totalorder %v326, %v344
        %vm388 = vcmp.eq.s32.totalorder %v326, %v348
        %vm389 = vcmp.eq.s32.totalorder %v327, %v336
        %vm390 = vcmp.eq.s32.totalorder %v327, %v340
        %vm391 = vcmp.eq.s32.totalorder %v327, %v344
        %vm392 = vcmp.eq.s32.totalorder %v327, %v348
        %vm393 = vcmp.eq.s32.totalorder %v328, %v336
        %vm394 = vcmp.eq.s32.totalorder %v328, %v340
        %vm395 = vcmp.eq.s32.totalorder %v328, %v344
        %vm396 = vcmp.eq.s32.totalorder %v328, %v348
        %vm397 = vcmp.eq.s32.totalorder %v329, %v336
        %vm398 = vcmp.eq.s32.totalorder %v329, %v340
        %vm399 = vcmp.eq.s32.totalorder %v329, %v344
        %vm400 = vcmp.eq.s32.totalorder %v329, %v348
        %vm401 = vcmp.eq.s32.totalorder %v330, %v336
        %vm402 = vcmp.eq.s32.totalorder %v330, %v340
        %vm403 = vcmp.eq.s32.totalorder %v330, %v344
        %vm404 = vcmp.eq.s32.totalorder %v330, %v348
        %vm405 = vcmp.eq.s32.totalorder %v331, %v336
        %vm406 = vcmp.eq.s32.totalorder %v331, %v340
        %vm407 = vcmp.eq.s32.totalorder %v331, %v344
        %vm408 = vcmp.eq.s32.totalorder %v331, %v348
        %vm409 = vcmp.eq.s32.totalorder %v332, %v336
        %vm410 = vcmp.eq.s32.totalorder %v332, %v340
        %vm411 = vcmp.eq.s32.totalorder %v332, %v344
        %vm412 = vcmp.eq.s32.totalorder %v332, %v348
        %v413 = vsel %vm349, 1, 0
        %v414 = vsel %vm350, 1, 0
        %v415 = vsel %vm351, 1, 0
        %v416 = vsel %vm352, 1, 0
        %v417 = vsel %vm353, 1, 0
        %v418 = vsel %vm354, 1, 0
        %v419 = vsel %vm355, 1, 0
        %v420 = vsel %vm356, 1, 0
        %v421 = vsel %vm357, 1, 0
        %v422 = vsel %vm358, 1, 0
        %v423 = vsel %vm359, 1, 0
        %v424 = vsel %vm360, 1, 0
        %v425 = vsel %vm361, 1, 0
        %v426 = vsel %vm362, 1, 0
        %v427 = vsel %vm363, 1, 0
        %v428 = vsel %vm364, 1, 0
        %v429 = vsel %vm365, 1, 0
        %v430 = vsel %vm366, 1, 0
        %v431 = vsel %vm367, 1, 0
        %v432 = vsel %vm368, 1, 0
        %v433 = vsel %vm369, 1, 0
        %v434 = vsel %vm370, 1, 0
        %v435 = vsel %vm371, 1, 0
        %v436 = vsel %vm372, 1, 0
        %v437 = vsel %vm373, 1, 0
        %v438 = vsel %vm374, 1, 0
        %v439 = vsel %vm375, 1, 0
        %v440 = vsel %vm376, 1, 0
        %v441 = vsel %vm377, 1, 0
        %v442 = vsel %vm378, 1, 0
        %v443 = vsel %vm379, 1, 0
        %v444 = vsel %vm380, 1, 0
        %v445 = vsel %vm381, 1, 0
        %v446 = vsel %vm382, 1, 0
        %v447 = vsel %vm383, 1, 0
        %v448 = vsel %vm384, 1, 0
        %v449 = vsel %vm385, 1, 0
        %v450 = vsel %vm386, 1, 0
        %v451 = vsel %vm387, 1, 0
        %v452 = vsel %vm388, 1, 0
        %v453 = vsel %vm389, 1, 0
        %v454 = vsel %vm390, 1, 0
        %v455 = vsel %vm391, 1, 0
        %v456 = vsel %vm392, 1, 0
        %v457 = vsel %vm393, 1, 0
        %v458 = vsel %vm394, 1, 0
        %v459 = vsel %vm395, 1, 0
        %v460 = vsel %vm396, 1, 0
        %v461 = vsel %vm397, 1, 0
        %v462 = vsel %vm398, 1, 0
        %v463 = vsel %vm399, 1, 0
        %v464 = vsel %vm400, 1, 0
        %v465 = vsel %vm401, 1, 0
        %v466 = vsel %vm402, 1, 0
        %v467 = vsel %vm403, 1, 0
        %v468 = vsel %vm404, 1, 0
        %v469 = vsel %vm405, 1, 0
        %v470 = vsel %vm406, 1, 0
        %v471 = vsel %vm407, 1, 0
        %v472 = vsel %vm408, 1, 0
        %v473 = vsel %vm409, 1, 0
        %v474 = vsel %vm410, 1, 0
        %v475 = vsel %vm411, 1, 0
        %v476 = vsel %vm412, 1, 0
        %v477 = vcvt.s32.f32 %v413
        %v478 = vcvt.s32.f32 %v414
        %v479 = vcvt.s32.f32 %v415
        %v480 = vcvt.s32.f32 %v416
        %v481 = vcvt.s32.f32 %v417
        %v482 = vcvt.s32.f32 %v418
        %v483 = vcvt.s32.f32 %v419
        %v484 = vcvt.s32.f32 %v420
        %v485 = vcvt.s32.f32 %v421
        %v486 = vcvt.s32.f32 %v422
        %v487 = vcvt.s32.f32 %v423
        %v488 = vcvt.s32.f32 %v424
        %v489 = vcvt.s32.f32 %v425
        %v490 = vcvt.s32.f32 %v426
        %v491 = vcvt.s32.f32 %v427
        %v492 = vcvt.s32.f32 %v428
        %v493 = vcvt.s32.f32 %v429
        %v494 = vcvt.s32.f32 %v430
        %v495 = vcvt.s32.f32 %v431
        %v496 = vcvt.s32.f32 %v432
        %v497 = vcvt.s32.f32 %v433
        %v498 = vcvt.s32.f32 %v434
        %v499 = vcvt.s32.f32 %v435
        %v500 = vcvt.s32.f32 %v436
        %v501 = vcvt.s32.f32 %v437
        %v502 = vcvt.s32.f32 %v438
        %v503 = vcvt.s32.f32 %v439
        %v504 = vcvt.s32.f32 %v440
        %v505 = vcvt.s32.f32 %v441
        %v506 = vcvt.s32.f32 %v442
        %v507 = vcvt.s32.f32 %v443
        %v508 = vcvt.s32.f32 %v444
        %v509 = vcvt.s32.f32 %v445
        %v510 = vcvt.s32.f32 %v446
        %v511 = vcvt.s32.f32 %v447
        %v512 = vcvt.s32.f32 %v448
        %v513 = vcvt.s32.f32 %v449
        %v514 = vcvt.s32.f32 %v450
        %v515 = vcvt.s32.f32 %v451
        %v516 = vcvt.s32.f32 %v452
        %v517 = vcvt.s32.f32 %v453
        %v518 = vcvt.s32.f32 %v454
        %v519 = vcvt.s32.f32 %v455
        %v520 = vcvt.s32.f32 %v456
        %v521 = vcvt.s32.f32 %v457
        %v522 = vcvt.s32.f32 %v458
        %v523 = vcvt.s32.f32 %v459
        %v524 = vcvt.s32.f32 %v460
        %v525 = vcvt.s32.f32 %v461
        %v526 = vcvt.s32.f32 %v462
        %v527 = vcvt.s32.f32 %v463
        %v528 = vcvt.s32.f32 %v464
        %v529 = vcvt.s32.f32 %v465
        %v530 = vcvt.s32.f32 %v466
        %v531 = vcvt.s32.f32 %v467
        %v532 = vcvt.s32.f32 %v468
        %v533 = vcvt.s32.f32 %v469
        %v534 = vcvt.s32.f32 %v470
        %v535 = vcvt.s32.f32 %v471
        %v536 = vcvt.s32.f32 %v472
        %v537 = vcvt.s32.f32 %v473
        %v538 = vcvt.s32.f32 %v474
        %v539 = vcvt.s32.f32 %v475
        %v540 = vcvt.s32.f32 %v476
        %v541 = vlaneseq
        %v542 = vshrl.u32 %v541, 7
        %v543 = vsub.s32 0, %v542
        %v544 = vrot.slane %v309, %v543
        %v545 = vlaneseq
        %v546 = vshrl.u32 %v545, 7
        %v547 = vsub.s32 1, %v546
        %v548 = vrot.slane %v309, %v547
        %v549 = vlaneseq
        %v550 = vshrl.u32 %v549, 7
        %v551 = vsub.s32 2, %v550
        %v552 = vrot.slane %v309, %v551
        %v553 = vlaneseq
        %v554 = vshrl.u32 %v553, 7
        %v555 = vsub.s32 3, %v554
        %v556 = vrot.slane %v309, %v555
        %vm557 = vcmp.eq.s32.totalorder %v317, %v544
        %vm558 = vcmp.eq.s32.totalorder %v317, %v548
        %vm559 = vcmp.eq.s32.totalorder %v317, %v552
        %vm560 = vcmp.eq.s32.totalorder %v317, %v556
        %vm561 = vcmp.eq.s32.totalorder %v318, %v544
        %vm562 = vcmp.eq.s32.totalorder %v318, %v548
        %vm563 = vcmp.eq.s32.totalorder %v318, %v552
        %vm564 = vcmp.eq.s32.totalorder %v318, %v556
        %vm565 = vcmp.eq.s32.totalorder %v319, %v544
        %vm566 = vcmp.eq.s32.totalorder %v319, %v548
        %vm567 = vcmp.eq.s32.totalorder %v319, %v552
        %vm568 = vcmp.eq.s32.totalorder %v319, %v556
        %vm569 = vcmp.eq.s32.totalorder %v320, %v544
        %vm570 = vcmp.eq.s32.totalorder %v320, %v548
        %vm571 = vcmp.eq.s32.totalorder %v320, %v552
        %vm572 = vcmp.eq.s32.totalorder %v320, %v556
        %vm573 = vcmp.eq.s32.totalorder %v321, %v544
        %vm574 = vcmp.eq.s32.totalorder %v321, %v548
        %vm575 = vcmp.eq.s32.totalorder %v321, %v552
        %vm576 = vcmp.eq.s32.totalorder %v321, %v556
        %vm577 = vcmp.eq.s32.totalorder %v322, %v544
        %vm578 = vcmp.eq.s32.totalorder %v322, %v548
        %vm579 = vcmp.eq.s32.totalorder %v322, %v552
        %vm580 = vcmp.eq.s32.totalorder %v322, %v556
        %vm581 = vcmp.eq.s32.totalorder %v323, %v544
        %vm582 = vcmp.eq.s32.totalorder %v323, %v548
        %vm583 = vcmp.eq.s32.totalorder %v323, %v552
        %vm584 = vcmp.eq.s32.totalorder %v323, %v556
        %vm585 = vcmp.eq.s32.totalorder %v324, %v544
        %vm586 = vcmp.eq.s32.totalorder %v324, %v548
        %vm587 = vcmp.eq.s32.totalorder %v324, %v552
        %vm588 = vcmp.eq.s32.totalorder %v324, %v556
        %vm589 = vcmp.eq.s32.totalorder %v325, %v544
        %vm590 = vcmp.eq.s32.totalorder %v325, %v548
        %vm591 = vcmp.eq.s32.totalorder %v325, %v552
        %vm592 = vcmp.eq.s32.totalorder %v325, %v556
        %vm593 = vcmp.eq.s32.totalorder %v326, %v544
        %vm594 = vcmp.eq.s32.totalorder %v326, %v548
        %vm595 = vcmp.eq.s32.totalorder %v326, %v552
        %vm596 = vcmp.eq.s32.totalorder %v326, %v556
        %vm597 = vcmp.eq.s32.totalorder %v327, %v544
        %vm598 = vcmp.eq.s32.totalorder %v327, %v548
        %vm599 = vcmp.eq.s32.totalorder %v327, %v552
        %vm600 = vcmp.eq.s32.totalorder %v327, %v556
        %vm601 = vcmp.eq.s32.totalorder %v328, %v544
        %vm602 = vcmp.eq.s32.totalorder %v328, %v548
        %vm603 = vcmp.eq.s32.totalorder %v328, %v552
        %vm604 = vcmp.eq.s32.totalorder %v328, %v556
        %vm605 = vcmp.eq.s32.totalorder %v329, %v544
        %vm606 = vcmp.eq.s32.totalorder %v329, %v548
        %vm607 = vcmp.eq.s32.totalorder %v329, %v552
        %vm608 = vcmp.eq.s32.totalorder %v329, %v556
        %vm609 = vcmp.eq.s32.totalorder %v330, %v544
        %vm610 = vcmp.eq.s32.totalorder %v330, %v548
        %vm611 = vcmp.eq.s32.totalorder %v330, %v552
        %vm612 = vcmp.eq.s32.totalorder %v330, %v556
        %vm613 = vcmp.eq.s32.totalorder %v331, %v544
        %vm614 = vcmp.eq.s32.totalorder %v331, %v548
        %vm615 = vcmp.eq.s32.totalorder %v331, %v552
        %vm616 = vcmp.eq.s32.totalorder %v331, %v556
        %vm617 = vcmp.eq.s32.totalorder %v332, %v544
        %vm618 = vcmp.eq.s32.totalorder %v332, %v548
        %vm619 = vcmp.eq.s32.totalorder %v332, %v552
        %vm620 = vcmp.eq.s32.totalorder %v332, %v556
        %v621 = vsel %vm557, 1, 0
        %v622 = vsel %vm558, 1, 0
        %v623 = vsel %vm559, 1, 0
        %v624 = vsel %vm560, 1, 0
        %v625 = vsel %vm561, 1, 0
        %v626 = vsel %vm562, 1, 0
        %v627 = vsel %vm563, 1, 0
        %v628 = vsel %vm564, 1, 0
        %v629 = vsel %vm565, 1, 0
        %v630 = vsel %vm566, 1, 0
        %v631 = vsel %vm567, 1, 0
        %v632 = vsel %vm568, 1, 0
        %v633 = vsel %vm569, 1, 0
        %v634 = vsel %vm570, 1, 0
        %v635 = vsel %vm571, 1, 0
        %v636 = vsel %vm572, 1, 0
        %v637 = vsel %vm573, 1, 0
        %v638 = vsel %vm574, 1, 0
        %v639 = vsel %vm575, 1, 0
        %v640 = vsel %vm576, 1, 0
        %v641 = vsel %vm577, 1, 0
        %v642 = vsel %vm578, 1, 0
        %v643 = vsel %vm579, 1, 0
        %v644 = vsel %vm580, 1, 0
        %v645 = vsel %vm581, 1, 0
        %v646 = vsel %vm582, 1, 0
        %v647 = vsel %vm583, 1, 0
        %v648 = vsel %vm584, 1, 0
        %v649 = vsel %vm585, 1, 0
        %v650 = vsel %vm586, 1, 0
        %v651 = vsel %vm587, 1, 0
        %v652 = vsel %vm588, 1, 0
        %v653 = vsel %vm589, 1, 0
        %v654 = vsel %vm590, 1, 0
        %v655 = vsel %vm591, 1, 0
        %v656 = vsel %vm592, 1, 0
        %v657 = vsel %vm593, 1, 0
        %v658 = vsel %vm594, 1, 0
        %v659 = vsel %vm595, 1, 0
        %v660 = vsel %vm596, 1, 0
        %v661 = vsel %vm597, 1, 0
        %v662 = vsel %vm598, 1, 0
        %v663 = vsel %vm599, 1, 0
        %v664 = vsel %vm600, 1, 0
        %v665 = vsel %vm601, 1, 0
        %v666 = vsel %vm602, 1, 0
        %v667 = vsel %vm603, 1, 0
        %v668 = vsel %vm604, 1, 0
        %v669 = vsel %vm605, 1, 0
        %v670 = vsel %vm606, 1, 0
        %v671 = vsel %vm607, 1, 0
        %v672 = vsel %vm608, 1, 0
        %v673 = vsel %vm609, 1, 0
        %v674 = vsel %vm610, 1, 0
        %v675 = vsel %vm611, 1, 0
        %v676 = vsel %vm612, 1, 0
        %v677 = vsel %vm613, 1, 0
        %v678 = vsel %vm614, 1, 0
        %v679 = vsel %vm615, 1, 0
        %v680 = vsel %vm616, 1, 0
        %v681 = vsel %vm617, 1, 0
        %v682 = vsel %vm618, 1, 0
        %v683 = vsel %vm619, 1, 0
        %v684 = vsel %vm620, 1, 0
        %v685 = vcvt.s32.f32 %v621
        %v686 = vcvt.s32.f32 %v622
        %v687 = vcvt.s32.f32 %v623
        %v688 = vcvt.s32.f32 %v624
        %v689 = vcvt.s32.f32 %v625
        %v690 = vcvt.s32.f32 %v626
        %v691 = vcvt.s32.f32 %v627
        %v692 = vcvt.s32.f32 %v628
        %v693 = vcvt.s32.f32 %v629
        %v694 = vcvt.s32.f32 %v630
        %v695 = vcvt.s32.f32 %v631
        %v696 = vcvt.s32.f32 %v632
        %v697 = vcvt.s32.f32 %v633
        %v698 = vcvt.s32.f32 %v634
        %v699 = vcvt.s32.f32 %v635
        %v700 = vcvt.s32.f32 %v636
        %v701 = vcvt.s32.f32 %v637
        %v702 = vcvt.s32.f32 %v638
        %v703 = vcvt.s32.f32 %v639
        %v704 = vcvt.s32.f32 %v640
        %v705 = vcvt.s32.f32 %v641
        %v706 = vcvt.s32.f32 %v642
        %v707 = vcvt.s32.f32 %v643
        %v708 = vcvt.s32.f32 %v644
        %v709 = vcvt.s32.f32 %v645
        %v710 = vcvt.s32.f32 %v646
        %v711 = vcvt.s32.f32 %v647
        %v712 = vcvt.s32.f32 %v648
        %v713 = vcvt.s32.f32 %v649
        %v714 = vcvt.s32.f32 %v650
        %v715 = vcvt.s32.f32 %v651
        %v716 = vcvt.s32.f32 %v652
        %v717 = vcvt.s32.f32 %v653
        %v718 = vcvt.s32.f32 %v654
        %v719 = vcvt.s32.f32 %v655
        %v720 = vcvt.s32.f32 %v656
        %v721 = vcvt.s32.f32 %v657
        %v722 = vcvt.s32.f32 %v658
        %v723 = vcvt.s32.f32 %v659
        %v724 = vcvt.s32.f32 %v660
        %v725 = vcvt.s32.f32 %v661
        %v726 = vcvt.s32.f32 %v662
        %v727 = vcvt.s32.f32 %v663
        %v728 = vcvt.s32.f32 %v664
        %v729 = vcvt.s32.f32 %v665
        %v730 = vcvt.s32.f32 %v666
        %v731 = vcvt.s32.f32 %v667
        %v732 = vcvt.s32.f32 %v668
        %v733 = vcvt.s32.f32 %v669
        %v734 = vcvt.s32.f32 %v670
        %v735 = vcvt.s32.f32 %v671
        %v736 = vcvt.s32.f32 %v672
        %v737 = vcvt.s32.f32 %v673
        %v738 = vcvt.s32.f32 %v674
        %v739 = vcvt.s32.f32 %v675
        %v740 = vcvt.s32.f32 %v676
        %v741 = vcvt.s32.f32 %v677
        %v742 = vcvt.s32.f32 %v678
        %v743 = vcvt.s32.f32 %v679
        %v744 = vcvt.s32.f32 %v680
        %v745 = vcvt.s32.f32 %v681
        %v746 = vcvt.s32.f32 %v682
        %v747 = vcvt.s32.f32 %v683
        %v748 = vcvt.s32.f32 %v684
        %749 = vmatprep.subr.mxu0 %v538
        %750 = vmatpush1.msra.mxu0 %v537
        %751 = vmatprep.subr.mxu0 %v534
        %752 = vmatpush1.msra.mxu0 %v533
        %753 = vmatprep.subr.mxu0 %v530
        %754 = vmatpush1.msra.mxu0 %v529
        %755 = vmatprep.subr.mxu0 %v526
        %756 = vmatpush1.msra.mxu0 %v525
        %757 = vmatprep.subr.mxu0 %v522
        %758 = vmatpush1.msra.mxu0 %v521
        %759 = vmatprep.subr.mxu0 %v518
        %760 = vmatpush1.msra.mxu0 %v517
        %761 = vmatprep.subr.mxu0 %v514
        %762 = vmatpush1.msra.mxu0 %v513
        %763 = vmatprep.subr.mxu0 %v510
        %764 = vmatpush1.msra.mxu0 %v509
        %765 = vmatprep.subr.mxu0 %v506
        %766 = vmatpush1.msra.mxu0 %v505
        %767 = vmatprep.subr.mxu0 %v502
        %768 = vmatpush1.msra.mxu0 %v501
        %769 = vmatprep.subr.mxu0 %v498
        %770 = vmatpush1.msra.mxu0 %v497
        %771 = vmatprep.subr.mxu0 %v494
        %772 = vmatpush1.msra.mxu0 %v493
        %773 = vmatprep.subr.mxu0 %v490
        %774 = vmatpush1.msra.mxu0 %v489
        %775 = vmatprep.subr.mxu0 %v486
        %776 = vmatpush1.msra.mxu0 %v485
        %777 = vmatprep.subr.mxu0 %v482
        %778 = vmatpush1.msra.mxu0 %v481
        %779 = vmatprep.subr.mxu0 %v478
        %780 = vmatpush1.msra.mxu0 %v477
        %781 = vmatprep.subr.mxu0 0.0
        %782 = vmatpush2.msra.mxu0 0.0
        %783 = vmatprep.subr.mxu0 0.0
        %784 = vmatpush2.msra.mxu0 0.0
        %785 = vmatprep.subr.mxu0 0.0
        %786 = vmatpush2.msra.mxu0 0.0
        %787 = vmatprep.subr.mxu0 0.0
        %788 = vmatpush2.msra.mxu0 0.0
        %789 = vmatprep.subr.mxu0 0.0
        %790 = vmatpush2.msra.mxu0 0.0
        %791 = vmatprep.subr.mxu0 0.0
        %792 = vmatpush2.msra.mxu0 0.0
        %793 = vmatprep.subr.mxu0 0.0
        %794 = vmatpush2.msra.mxu0 0.0
        %795 = vmatprep.subr.mxu0 0.0
        %796 = vmatpush2.msra.mxu0 0.0
        %797 = vmatprep.subr.mxu0 0.0
        %798 = vmatpush2.msra.mxu0 0.0
        %799 = vmatprep.subr.mxu0 0.0
        %800 = vmatpush2.msra.mxu0 0.0
        %801 = vmatprep.subr.mxu0 0.0
        %802 = vmatpush2.msra.mxu0 0.0
        %803 = vmatprep.subr.mxu0 0.0
        %804 = vmatpush2.msra.mxu0 0.0
        %805 = vmatprep.subr.mxu0 0.0
        %806 = vmatpush2.msra.mxu0 0.0
        %807 = vmatprep.subr.mxu0 0.0
        %808 = vmatpush2.msra.mxu0 0.0
        %809 = vmatprep.subr.mxu0 0.0
        %810 = vmatpush2.msra.mxu0 0.0
        %811 = vmatprep.subr.mxu0 0.0
        %812 = vmatpush2.msra.mxu0 0.0
        %813 = vmatprep.mubr.f32.mxu0 0.0
        %814 = vmatmul.mubr.f32.gmra.mxu0 %v310
        %v815 = vpop.f32.mrf.mxu0
        %v816 = vadd.f32 0.0, %v815
        %v817 = vpop.f32.mrf.mxu0
        %v818 = vadd.f32 0.0, %v817
        %819 = vmatprep.mubr.f32.mxu0 0.0
        %820 = vmatmul.mubr.f32.gmra.mxu0 %v311
        %v821 = vpop.f32.mrf.mxu0
        %v822 = vadd.f32 0.0, %v821
        %v823 = vpop.f32.mrf.mxu0
        %v824 = vadd.f32 0.0, %v823
        %825 = vmatprep.mubr.f32.mxu0 0.0
        %826 = vmatmul.mubr.f32.gmra.mxu0 %v312
        %v827 = vpop.f32.mrf.mxu0
        %v828 = vadd.f32 0.0, %v827
        %v829 = vpop.f32.mrf.mxu0
        %v830 = vadd.f32 0.0, %v829
        %831 = vmatprep.mubr.f32.mxu0 0.0
        %832 = vmatmul.mubr.f32.gmra.mxu0 %v313
        %v833 = vpop.f32.mrf.mxu0
        %v834 = vadd.f32 0.0, %v833
        %v835 = vpop.f32.mrf.mxu0
        %v836 = vadd.f32 0.0, %v835
        %837 = vmatprep.mubr.f32.mxu0 0.0
        %838 = vmatmul.mubr.f32.gmra.mxu0 %v314
        %v839 = vpop.f32.mrf.mxu0
        %v840 = vadd.f32 0.0, %v839
        %v841 = vpop.f32.mrf.mxu0
        %v842 = vadd.f32 0.0, %v841
        %843 = vdwg.mxu0
        %844 = vmatprep.subr.mxu0 %v540
        %845 = vmatpush1.msra.mxu0 %v539
        %846 = vmatprep.subr.mxu0 %v536
        %847 = vmatpush1.msra.mxu0 %v535
        %848 = vmatprep.subr.mxu0 %v532
        %849 = vmatpush1.msra.mxu0 %v531
        %850 = vmatprep.subr.mxu0 %v528
        %851 = vmatpush1.msra.mxu0 %v527
        %852 = vmatprep.subr.mxu0 %v524
        %853 = vmatpush1.msra.mxu0 %v523
        %854 = vmatprep.subr.mxu0 %v520
        %855 = vmatpush1.msra.mxu0 %v519
        %856 = vmatprep.subr.mxu0 %v516
        %857 = vmatpush1.msra.mxu0 %v515
        %858 = vmatprep.subr.mxu0 %v512
        %859 = vmatpush1.msra.mxu0 %v511
        %860 = vmatprep.subr.mxu0 %v508
        %861 = vmatpush1.msra.mxu0 %v507
        %862 = vmatprep.subr.mxu0 %v504
        %863 = vmatpush1.msra.mxu0 %v503
        %864 = vmatprep.subr.mxu0 %v500
        %865 = vmatpush1.msra.mxu0 %v499
        %866 = vmatprep.subr.mxu0 %v496
        %867 = vmatpush1.msra.mxu0 %v495
        %868 = vmatprep.subr.mxu0 %v492
        %869 = vmatpush1.msra.mxu0 %v491
        %870 = vmatprep.subr.mxu0 %v488
        %871 = vmatpush1.msra.mxu0 %v487
        %872 = vmatprep.subr.mxu0 %v484
        %873 = vmatpush1.msra.mxu0 %v483
        %874 = vmatprep.subr.mxu0 %v480
        %875 = vmatpush1.msra.mxu0 %v479
        %876 = vmatprep.subr.mxu0 0.0
        %877 = vmatpush2.msra.mxu0 0.0
        %878 = vmatprep.subr.mxu0 0.0
        %879 = vmatpush2.msra.mxu0 0.0
        %880 = vmatprep.subr.mxu0 0.0
        %881 = vmatpush2.msra.mxu0 0.0
        %882 = vmatprep.subr.mxu0 0.0
        %883 = vmatpush2.msra.mxu0 0.0
        %884 = vmatprep.subr.mxu0 0.0
        %885 = vmatpush2.msra.mxu0 0.0
        %886 = vmatprep.subr.mxu0 0.0
        %887 = vmatpush2.msra.mxu0 0.0
        %888 = vmatprep.subr.mxu0 0.0
        %889 = vmatpush2.msra.mxu0 0.0
        %890 = vmatprep.subr.mxu0 0.0
        %891 = vmatpush2.msra.mxu0 0.0
        %892 = vmatprep.subr.mxu0 0.0
        %893 = vmatpush2.msra.mxu0 0.0
        %894 = vmatprep.subr.mxu0 0.0
        %895 = vmatpush2.msra.mxu0 0.0
        %896 = vmatprep.subr.mxu0 0.0
        %897 = vmatpush2.msra.mxu0 0.0
        %898 = vmatprep.subr.mxu0 0.0
        %899 = vmatpush2.msra.mxu0 0.0
        %900 = vmatprep.subr.mxu0 0.0
        %901 = vmatpush2.msra.mxu0 0.0
        %902 = vmatprep.subr.mxu0 0.0
        %903 = vmatpush2.msra.mxu0 0.0
        %904 = vmatprep.subr.mxu0 0.0
        %905 = vmatpush2.msra.mxu0 0.0
        %906 = vmatprep.subr.mxu0 0.0
        %907 = vmatpush2.msra.mxu0 0.0
        %908 = vmatprep.mubr.f32.mxu0 0.0
        %909 = vmatmul.mubr.f32.gmra.mxu0 %v310
        %v910 = vpop.f32.mrf.mxu0
        %v911 = vadd.f32 0.0, %v910
        %v912 = vpop.f32.mrf.mxu0
        %v913 = vadd.f32 0.0, %v912
        %914 = vmatprep.mubr.f32.mxu0 0.0
        %915 = vmatmul.mubr.f32.gmra.mxu0 %v311
        %v916 = vpop.f32.mrf.mxu0
        %v917 = vadd.f32 0.0, %v916
        %v918 = vpop.f32.mrf.mxu0
        %v919 = vadd.f32 0.0, %v918
        %920 = vmatprep.mubr.f32.mxu0 0.0
        %921 = vmatmul.mubr.f32.gmra.mxu0 %v312
        %v922 = vpop.f32.mrf.mxu0
        %v923 = vadd.f32 0.0, %v922
        %v924 = vpop.f32.mrf.mxu0
        %v925 = vadd.f32 0.0, %v924
        %926 = vmatprep.mubr.f32.mxu0 0.0
        %927 = vmatmul.mubr.f32.gmra.mxu0 %v313
        %v928 = vpop.f32.mrf.mxu0
        %v929 = vadd.f32 0.0, %v928
        %v930 = vpop.f32.mrf.mxu0
        %v931 = vadd.f32 0.0, %v930
        %932 = vmatprep.mubr.f32.mxu0 0.0
        %933 = vmatmul.mubr.f32.gmra.mxu0 %v314
        %v934 = vpop.f32.mrf.mxu0
        %v935 = vadd.f32 0.0, %v934
        %v936 = vpop.f32.mrf.mxu0
        %v937 = vadd.f32 0.0, %v936
        %938 = vdwg.mxu0
        %939 = vmatprep.subr.mxu0 %v746
        %940 = vmatpush1.msra.mxu0 %v745
        %941 = vmatprep.subr.mxu0 %v742
        %942 = vmatpush1.msra.mxu0 %v741
        %943 = vmatprep.subr.mxu0 %v738
        %944 = vmatpush1.msra.mxu0 %v737
        %945 = vmatprep.subr.mxu0 %v734
        %946 = vmatpush1.msra.mxu0 %v733
        %947 = vmatprep.subr.mxu0 %v730
        %948 = vmatpush1.msra.mxu0 %v729
        %949 = vmatprep.subr.mxu0 %v726
        %950 = vmatpush1.msra.mxu0 %v725
        %951 = vmatprep.subr.mxu0 %v722
        %952 = vmatpush1.msra.mxu0 %v721
        %953 = vmatprep.subr.mxu0 %v718
        %954 = vmatpush1.msra.mxu0 %v717
        %955 = vmatprep.subr.mxu0 %v714
        %956 = vmatpush1.msra.mxu0 %v713
        %957 = vmatprep.subr.mxu0 %v710
        %958 = vmatpush1.msra.mxu0 %v709
        %959 = vmatprep.subr.mxu0 %v706
        %960 = vmatpush1.msra.mxu0 %v705
        %961 = vmatprep.subr.mxu0 %v702
        %962 = vmatpush1.msra.mxu0 %v701
        %963 = vmatprep.subr.mxu0 %v698
        %964 = vmatpush1.msra.mxu0 %v697
        %965 = vmatprep.subr.mxu0 %v694
        %966 = vmatpush1.msra.mxu0 %v693
        %967 = vmatprep.subr.mxu0 %v690
        %968 = vmatpush1.msra.mxu0 %v689
        %969 = vmatprep.subr.mxu0 %v686
        %970 = vmatpush1.msra.mxu0 %v685
        %971 = vmatprep.subr.mxu0 0.0
        %972 = vmatpush2.msra.mxu0 0.0
        %973 = vmatprep.subr.mxu0 0.0
        %974 = vmatpush2.msra.mxu0 0.0
        %975 = vmatprep.subr.mxu0 0.0
        %976 = vmatpush2.msra.mxu0 0.0
        %977 = vmatprep.subr.mxu0 0.0
        %978 = vmatpush2.msra.mxu0 0.0
        %979 = vmatprep.subr.mxu0 0.0
        %980 = vmatpush2.msra.mxu0 0.0
        %981 = vmatprep.subr.mxu0 0.0
        %982 = vmatpush2.msra.mxu0 0.0
        %983 = vmatprep.subr.mxu0 0.0
        %984 = vmatpush2.msra.mxu0 0.0
        %985 = vmatprep.subr.mxu0 0.0
        %986 = vmatpush2.msra.mxu0 0.0
        %987 = vmatprep.subr.mxu0 0.0
        %988 = vmatpush2.msra.mxu0 0.0
        %989 = vmatprep.subr.mxu0 0.0
        %990 = vmatpush2.msra.mxu0 0.0
        %991 = vmatprep.subr.mxu0 0.0
        %992 = vmatpush2.msra.mxu0 0.0
        %993 = vmatprep.subr.mxu0 0.0
        %994 = vmatpush2.msra.mxu0 0.0
        %995 = vmatprep.subr.mxu0 0.0
        %996 = vmatpush2.msra.mxu0 0.0
        %997 = vmatprep.subr.mxu0 0.0
        %998 = vmatpush2.msra.mxu0 0.0
        %999 = vmatprep.subr.mxu0 0.0
        %1000 = vmatpush2.msra.mxu0 0.0
        %1001 = vmatprep.subr.mxu0 0.0
        %1002 = vmatpush2.msra.mxu0 0.0
        %1003 = vmatprep.mubr.f32.mxu0 0.0
        %1004 = vmatmul.mubr.f32.gmra.mxu0 %v310
        %v1005 = vpop.f32.mrf.mxu0
        %v1006 = vadd.f32 0.0, %v1005
        %v1007 = vpop.f32.mrf.mxu0
        %v1008 = vadd.f32 0.0, %v1007
        %1009 = vmatprep.mubr.f32.mxu0 0.0
        %1010 = vmatmul.mubr.f32.gmra.mxu0 %v311
        %v1011 = vpop.f32.mrf.mxu0
        %v1012 = vadd.f32 0.0, %v1011
        %v1013 = vpop.f32.mrf.mxu0
        %v1014 = vadd.f32 0.0, %v1013
        %1015 = vmatprep.mubr.f32.mxu0 0.0
        %1016 = vmatmul.mubr.f32.gmra.mxu0 %v312
        %v1017 = vpop.f32.mrf.mxu0
        %v1018 = vadd.f32 0.0, %v1017
        %v1019 = vpop.f32.mrf.mxu0
        %v1020 = vadd.f32 0.0, %v1019
        %1021 = vmatprep.mubr.f32.mxu0 0.0
        %1022 = vmatmul.mubr.f32.gmra.mxu0 %v313
        %v1023 = vpop.f32.mrf.mxu0
        %v1024 = vadd.f32 0.0, %v1023
        %v1025 = vpop.f32.mrf.mxu0
        %v1026 = vadd.f32 0.0, %v1025
        %1027 = vmatprep.mubr.f32.mxu0 0.0
        %1028 = vmatmul.mubr.f32.gmra.mxu0 %v314
        %v1029 = vpop.f32.mrf.mxu0
        %v1030 = vadd.f32 0.0, %v1029
        %v1031 = vpop.f32.mrf.mxu0
        %v1032 = vadd.f32 0.0, %v1031
        %1033 = vdwg.mxu0
        %1034 = vmatprep.subr.mxu0 %v748
        %1035 = vmatpush1.msra.mxu0 %v747
        %1036 = vmatprep.subr.mxu0 %v744
        %1037 = vmatpush1.msra.mxu0 %v743
        %1038 = vmatprep.subr.mxu0 %v740
        %1039 = vmatpush1.msra.mxu0 %v739
        %1040 = vmatprep.subr.mxu0 %v736
        %1041 = vmatpush1.msra.mxu0 %v735
        %1042 = vmatprep.subr.mxu0 %v732
        %1043 = vmatpush1.msra.mxu0 %v731
        %1044 = vmatprep.subr.mxu0 %v728
        %1045 = vmatpush1.msra.mxu0 %v727
        %1046 = vmatprep.subr.mxu0 %v724
        %1047 = vmatpush1.msra.mxu0 %v723
        %1048 = vmatprep.subr.mxu0 %v720
        %1049 = vmatpush1.msra.mxu0 %v719
        %1050 = vmatprep.subr.mxu0 %v716
        %1051 = vmatpush1.msra.mxu0 %v715
        %1052 = vmatprep.subr.mxu0 %v712
        %1053 = vmatpush1.msra.mxu0 %v711
        %1054 = vmatprep.subr.mxu0 %v708
        %1055 = vmatpush1.msra.mxu0 %v707
        %1056 = vmatprep.subr.mxu0 %v704
        %1057 = vmatpush1.msra.mxu0 %v703
        %1058 = vmatprep.subr.mxu0 %v700
        %1059 = vmatpush1.msra.mxu0 %v699
        %1060 = vmatprep.subr.mxu0 %v696
        %1061 = vmatpush1.msra.mxu0 %v695
        %1062 = vmatprep.subr.mxu0 %v692
        %1063 = vmatpush1.msra.mxu0 %v691
        %1064 = vmatprep.subr.mxu0 %v688
        %1065 = vmatpush1.msra.mxu0 %v687
        %1066 = vmatprep.subr.mxu0 0.0
        %1067 = vmatpush2.msra.mxu0 0.0
        %1068 = vmatprep.subr.mxu0 0.0
        %1069 = vmatpush2.msra.mxu0 0.0
        %1070 = vmatprep.subr.mxu0 0.0
        %1071 = vmatpush2.msra.mxu0 0.0
        %1072 = vmatprep.subr.mxu0 0.0
        %1073 = vmatpush2.msra.mxu0 0.0
        %1074 = vmatprep.subr.mxu0 0.0
        %1075 = vmatpush2.msra.mxu0 0.0
        %1076 = vmatprep.subr.mxu0 0.0
        %1077 = vmatpush2.msra.mxu0 0.0
        %1078 = vmatprep.subr.mxu0 0.0
        %1079 = vmatpush2.msra.mxu0 0.0
        %1080 = vmatprep.subr.mxu0 0.0
        %1081 = vmatpush2.msra.mxu0 0.0
        %1082 = vmatprep.subr.mxu0 0.0
        %1083 = vmatpush2.msra.mxu0 0.0
        %1084 = vmatprep.subr.mxu0 0.0
        %1085 = vmatpush2.msra.mxu0 0.0
        %1086 = vmatprep.subr.mxu0 0.0
        %1087 = vmatpush2.msra.mxu0 0.0
        %1088 = vmatprep.subr.mxu0 0.0
        %1089 = vmatpush2.msra.mxu0 0.0
        %1090 = vmatprep.subr.mxu0 0.0
        %1091 = vmatpush2.msra.mxu0 0.0
        %1092 = vmatprep.subr.mxu0 0.0
        %1093 = vmatpush2.msra.mxu0 0.0
        %1094 = vmatprep.subr.mxu0 0.0
        %1095 = vmatpush2.msra.mxu0 0.0
        %1096 = vmatprep.subr.mxu0 0.0
        %1097 = vmatpush2.msra.mxu0 0.0
        %1098 = vmatprep.mubr.f32.mxu0 0.0
        %1099 = vmatmul.mubr.f32.gmra.mxu0 %v310
        %v1100 = vpop.f32.mrf.mxu0
        %v1101 = vadd.f32 0.0, %v1100
        %v1102 = vpop.f32.mrf.mxu0
        %v1103 = vadd.f32 0.0, %v1102
        %1104 = vmatprep.mubr.f32.mxu0 0.0
        %1105 = vmatmul.mubr.f32.gmra.mxu0 %v311
        %v1106 = vpop.f32.mrf.mxu0
        %v1107 = vadd.f32 0.0, %v1106
        %v1108 = vpop.f32.mrf.mxu0
        %v1109 = vadd.f32 0.0, %v1108
        %1110 = vmatprep.mubr.f32.mxu0 0.0
        %1111 = vmatmul.mubr.f32.gmra.mxu0 %v312
        %v1112 = vpop.f32.mrf.mxu0
        %v1113 = vadd.f32 0.0, %v1112
        %v1114 = vpop.f32.mrf.mxu0
        %v1115 = vadd.f32 0.0, %v1114
        %1116 = vmatprep.mubr.f32.mxu0 0.0
        %1117 = vmatmul.mubr.f32.gmra.mxu0 %v313
        %v1118 = vpop.f32.mrf.mxu0
        %v1119 = vadd.f32 0.0, %v1118
        %v1120 = vpop.f32.mrf.mxu0
        %v1121 = vadd.f32 0.0, %v1120
        %1122 = vmatprep.mubr.f32.mxu0 0.0
        %1123 = vmatmul.mubr.f32.gmra.mxu0 %v314
        %v1124 = vpop.f32.mrf.mxu0
        %v1125 = vadd.f32 0.0, %v1124
        %v1126 = vpop.f32.mrf.mxu0
        %v1127 = vadd.f32 0.0, %v1126
        %1128 = vdwg.mxu0
        %v1129 = vmul.f32 %v816, %v1006
        %v1130 = vmul.f32 %v818, %v1008
        %v1131 = vmul.f32 %v911, %v1101
        %v1132 = vmul.f32 %v913, %v1103
        %v1133 = vmul.f32 %v822, %v1012
        %v1134 = vmul.f32 %v824, %v1014
        %v1135 = vmul.f32 %v917, %v1107
        %v1136 = vmul.f32 %v919, %v1109
        %v1137 = vmul.f32 %v828, %v1018
        %v1138 = vmul.f32 %v830, %v1020
        %v1139 = vmul.f32 %v923, %v1113
        %v1140 = vmul.f32 %v925, %v1115
        %v1141 = vmul.f32 %v834, %v1024
        %v1142 = vmul.f32 %v836, %v1026
        %v1143 = vmul.f32 %v929, %v1119
        %v1144 = vmul.f32 %v931, %v1121
        %v1145 = vadd.f32 %v1129, %v1133
        %v1146 = vadd.f32 %v1145, %v1137
        %v1147 = vadd.f32 %v1146, %v1141
        %v1148 = vrot.slane %v1147, 4
        %v1149 = vadd.f32 %v1147, %v1148
        %v1150 = vrot.slane %v1149, 2
        %v1151 = vadd.f32 %v1149, %v1150
        %v1152 = vrot.slane %v1151, 1
        %v1153 = vadd.f32 %v1151, %v1152
        %v1154 = vadd.f32 %v1130, %v1134
        %v1155 = vadd.f32 %v1154, %v1138
        %v1156 = vadd.f32 %v1155, %v1142
        %v1157 = vrot.slane %v1156, 4
        %v1158 = vadd.f32 %v1156, %v1157
        %v1159 = vrot.slane %v1158, 2
        %v1160 = vadd.f32 %v1158, %v1159
        %v1161 = vrot.slane %v1160, 1
        %v1162 = vadd.f32 %v1160, %v1161
        %v1163 = vadd.f32 %v1131, %v1135
        %v1164 = vadd.f32 %v1163, %v1139
        %v1165 = vadd.f32 %v1164, %v1143
        %v1166 = vrot.slane %v1165, 4
        %v1167 = vadd.f32 %v1165, %v1166
        %v1168 = vrot.slane %v1167, 2
        %v1169 = vadd.f32 %v1167, %v1168
        %v1170 = vrot.slane %v1169, 1
        %v1171 = vadd.f32 %v1169, %v1170
        %v1172 = vadd.f32 %v1132, %v1136
        %v1173 = vadd.f32 %v1172, %v1140
        %v1174 = vadd.f32 %v1173, %v1144
        %v1175 = vrot.slane %v1174, 4
        %v1176 = vadd.f32 %v1174, %v1175
        %v1177 = vrot.slane %v1176, 2
        %v1178 = vadd.f32 %v1176, %v1177
        %v1179 = vrot.slane %v1178, 1
        %v1180 = vadd.f32 %v1178, %v1179
        %v1181 = vadd.f32 %v840, %v1030
        %v1182 = vadd.f32 %v842, %v1032
        %v1183 = vadd.f32 %v935, %v1125
        %v1184 = vadd.f32 %v937, %v1127
        %v1186 = vlaneseq
        %v1187 = vshrl.u32 %v1186, 7
        %v1188 = vsub.s32 0, %v1187
        %v1189 = vrot.slane %v315, %v1188
        %v1190 = vlaneseq
        %v1191 = vshrl.u32 %v1190, 7
        %v1192 = vsub.s32 2, %v1191
        %v1193 = vrot.slane %v315, %v1192
        %v1194 = vlaneseq
        %v1195 = vshrl.u32 %v1194, 7
        %v1196 = vsub.s32 4, %v1195
        %v1197 = vrot.slane %v315, %v1196
        %v1198 = vlaneseq
        %v1199 = vshrl.u32 %v1198, 7
        %v1200 = vsub.s32 6, %v1199
        %v1201 = vrot.slane %v315, %v1200
        %v1206 = vadd.f32 %v1153, %v1189
        %v1207 = vadd.f32 %v1162, %v1193
        %v1208 = vadd.f32 %v1171, %v1197
        %v1209 = vadd.f32 %v1180, %v1201
        %v1210 = vlaneseq
        %v1211 = vshrl.u32 %v1210, 7
        %v1212 = vsub.s32 1, %v1211
        %v1213 = vrot.slane %v315, %v1212
        %v1214 = vlaneseq
        %v1215 = vshrl.u32 %v1214, 7
        %v1216 = vsub.s32 3, %v1215
        %v1217 = vrot.slane %v315, %v1216
        %v1218 = vlaneseq
        %v1219 = vshrl.u32 %v1218, 7
        %v1220 = vsub.s32 5, %v1219
        %v1221 = vrot.slane %v315, %v1220
        %v1222 = vlaneseq
        %v1223 = vshrl.u32 %v1222, 7
        %v1224 = vsub.s32 7, %v1223
        %v1225 = vrot.slane %v315, %v1224
        %vm1230 = vcmp.ge.f32.partialorder %v1206, %v1213
        %vm1231 = vcmp.ge.f32.partialorder %v1207, %v1217
        %vm1232 = vcmp.ge.f32.partialorder %v1208, %v1221
        %vm1233 = vcmp.ge.f32.partialorder %v1209, %v1225
        %v1234 = vsel %vm1230, 1, 0
        %v1235 = vsel %vm1231, 1, 0
        %v1236 = vsel %vm1232, 1, 0
        %v1237 = vsel %vm1233, 1, 0
        %v1238 = vcvt.s32.f32 %v1234
        %v1239 = vcvt.s32.f32 %v1235
        %v1240 = vcvt.s32.f32 %v1236
        %v1241 = vcvt.s32.f32 %v1237
        %v1242 = vxor.u32 %v1153, 2147483648
        %v1243 = vxor.u32 %v1162, 2147483648
        %v1244 = vxor.u32 %v1171, 2147483648
        %v1245 = vxor.u32 %v1180, 2147483648
        %v1246 = vmul.f32 %v1242, 1.442695
        %v1247 = vpow.pop %v1246
        %v1248 = vmul.f32 %v1243, 1.442695
        %v1249 = vpow.pop %v1248
        %v1250 = vmul.f32 %v1244, 1.442695
        %v1251 = vpow.pop %v1250
        %v1252 = vmul.f32 %v1245, 1.442695
        %v1253 = vpow.pop %v1252
        %v1254 = vadd.f32 %v1247, 1.0
        %v1255 = vadd.f32 %v1249, 1.0
        %v1256 = vadd.f32 %v1251, 1.0
        %v1257 = vadd.f32 %v1253, 1.0
        %v1258 = vrcp.pop %v1254
        %v1259 = vmul.f32 1.0, %v1258
        %v1260 = vrcp.pop %v1255
        %v1261 = vmul.f32 1.0, %v1260
        %v1262 = vrcp.pop %v1256
        %v1263 = vmul.f32 1.0, %v1262
        %v1264 = vrcp.pop %v1257
        %v1265 = vmul.f32 1.0, %v1264
        %v1266 = vmul.f32 %v1238, %v1259
        %v1267 = vmul.f32 %v1239, %v1261
        %v1268 = vmul.f32 %v1240, %v1263
        %v1269 = vmul.f32 %v1241, %v1265
        %v1270 = vsub.f32 1.0, %v1238
        %v1271 = vsub.f32 1.0, %v1239
        %v1272 = vsub.f32 1.0, %v1240
        %v1273 = vsub.f32 1.0, %v1241
        %v1274 = vxor.u32 %v1181, 2147483648
        %v1275 = vxor.u32 %v1182, 2147483648
        %v1276 = vxor.u32 %v1183, 2147483648
        %v1277 = vxor.u32 %v1184, 2147483648
        %v1278 = vmul.f32 %v1274, 1.442695
        %v1279 = vpow.pop %v1278
        %v1280 = vmul.f32 %v1275, 1.442695
        %v1281 = vpow.pop %v1280
        %v1282 = vmul.f32 %v1276, 1.442695
        %v1283 = vpow.pop %v1282
        %v1284 = vmul.f32 %v1277, 1.442695
        %v1285 = vpow.pop %v1284
        %v1286 = vadd.f32 %v1279, 1.0
        %v1287 = vadd.f32 %v1281, 1.0
        %v1288 = vadd.f32 %v1283, 1.0
        %v1289 = vadd.f32 %v1285, 1.0
        %v1290 = vrcp.pop %v1286
        %v1291 = vmul.f32 1.0, %v1290
        %v1292 = vrcp.pop %v1287
        %v1293 = vmul.f32 1.0, %v1292
        %v1294 = vrcp.pop %v1288
        %v1295 = vmul.f32 1.0, %v1294
        %v1296 = vrcp.pop %v1289
        %v1297 = vmul.f32 1.0, %v1296
        %v1298 = vmul.f32 %v1270, %v1291
        %v1299 = vmul.f32 %v1271, %v1293
        %v1300 = vmul.f32 %v1272, %v1295
        %v1301 = vmul.f32 %v1273, %v1297
        %v1302 = vadd.f32 %v1266, %v1298
        %v1303 = vadd.f32 %v1267, %v1299
        %v1304 = vadd.f32 %v1268, %v1300
        %v1305 = vadd.f32 %v1269, %v1301
        %v1310 = vcombine.low %v1302, %v1303
        %v1311 = vcombine.low %v1304, %v1305
        %v1313 = vunpack.c.l.s4 1966171168
        %v1314 = vunpack.c.0.s8 %v1313
        %v1315 = vlaneseq
        %v1316 = vshrl.u32 %v1315, 7
        %v1317 = vsub.s32 %v1314, %v1316
        %v1318 = vrot.slane %v1310, %v1317
        %v1320 = vunpack.c.l.s4 1966171168
        %v1321 = vunpack.c.0.s8 %v1320
        %v1322 = vlaneseq
        %v1323 = vshrl.u32 %v1322, 7
        %v1324 = vsub.s32 %v1321, %v1323
        %v1325 = vrot.slane %v1311, %v1324
        %v1326 = vcombine.low %v1318, %v1325
        %v1328 = vunpack.c.l.s4 1966171168
        %v1329 = vunpack.c.0.s8 %v1328
        %v1330 = vlaneseq
        %v1331 = vshrl.u32 %v1330, 7
        %v1332 = vsub.s32 %v1329, %v1331
        %v1333 = vrot.slane %v1326, %v1332
        %v1335 = vlaneseq
        %vm1336 = vcmp.ge.s32.totalorder %v1335, 0
        %vm1337 = vcmp.lt.s32.totalorder %v1335, 512
        %vm1338 = vmand %vm1336, %vm1337
        %1339 = vst.msk [vmem:[%s303] sm:$0xf] %vm1338, %v1333
        %s1340 = sand.u32 %s134, 1
        %s1341 = scalar_lea.sflag [#allocation4], %s1340
        %s1342 = sand.u32 %s134, 1
        %s1343 = smul.addr %s1342, 4
        %s1344 = scalar_lea.vmem [#allocation10], %s1343
        // Predicated region
        $region53: #{tpu_custom_call.1} parent=35 // pred_check
          %p1345 = pneg %p144
        $region54: #{tpu_custom_call.1} parent=35 // pred_check_branch
          %1347 = sbr.rel (%p1345) target = $region56
        $region55: #{tpu_custom_call.1} parent=35 // pred_region
          %s1348 = smul.u32 4, %s27
          %s1350 = ssub.s32 64, 64
          %1351 = vsyncadd %s1341, %s1350
          %s1352 = smul.addr %s1348, 16
          %s1353 = scalar_lea.hbm %s4, %s1352
          %s1355 = sshll.u32 %s1344, 4
          %s1356 = int_to_ptr.vmem [resolvable:$true] %s1355
          %1358 = dma.vmem_to_hbm [thread:$0]  %s1356, 64, %s1353, %s1341
        $region56: #{tpu_custom_call.1} parent=35 // pred_fallthru
          _
      $region36: #{tpu_custom_call.1} parent=5 // pred_fallthru
        _
      %p1359 = scmp.le.s32.totalorder 2, %s22
      // Predicated region
      $region57: #{tpu_custom_call.1} parent=5 // pred_check
        %p1360 = pneg %p1359
      $region58: #{tpu_custom_call.1} parent=5 // pred_check_branch
        %1362 = sbr.rel (%p1360) target = $region60
      $region59: #{tpu_custom_call.1} parent=5 // pred_region
        %s1363 = ssub.s32 %s22, 2
        // Predicated region
        $region61: #{tpu_custom_call.1} parent=59 // pred_check
          %p1364 = pneg %p150
        $region62: #{tpu_custom_call.1} parent=59 // pred_check_branch
          %1366 = sbr.rel (%p1364) target = $region64
        $region63: #{tpu_custom_call.1} parent=59 // pred_region
          %s1367 = sand.u32 %s135, 1
          %s1368 = scalar_lea.sflag [#allocation4], %s1367
          %s1369 = sand.u32 %s135, 1
          %s1370 = smul.addr %s1369, 4
          %s1371 = scalar_lea.vmem [#allocation10], %s1370
          %1372 = dma.done %s1368, 64
        $region64: #{tpu_custom_call.1} parent=59 // pred_fallthru
          _
      $region60: #{tpu_custom_call.1} parent=5 // pred_fallthru
        _
    $region6: #{tpu_custom_call.1} parent=1 // loop_footer
      %s26 = sadd.s32 1, %s22
    $region7: #{tpu_custom_call.1} parent=1 // loop_footer_branch
      %21 = sbr.rel target = $region3
    $region8: #{tpu_custom_call.1} parent=1 // loop_exit
      _
    %1373 = vsyncpa [#allocation3], 1
    %s1374 = scalar_lea.sflag [#allocation3], 1
    %1375 = vsyncpa %s1374, 1
    %1376 = vsyncpa [#allocation6], 1
    %s1377 = scalar_lea.sflag [#allocation6], 1
    %1378 = vsyncpa %s1377, 1
    %1379 = vsyncpa [#allocation9], 1
    %s1380 = scalar_lea.sflag [#allocation9], 1
    %1381 = vsyncpa %s1380, 1
    %1382 = vsyncpa [#allocation4], 1
    %s1383 = scalar_lea.sflag [#allocation4], 1
    %1384 = vsyncpa %s1383, 1

</llo_original>
